<compile_context>
chip_gen: v7x
topology: tpu7x:2x2x1
jax: 0.10.0
libtpu: 0.0.40
codegen_flags: <defaults>
</compile_context>

<pallas_src>
import functools

import jax
import jax.numpy as jnp
from jax import lax
from jax.experimental import pallas as pl
from jax.experimental.pallas import tpu as pltpu


def _round_up(x, m):
    return (x + m - 1) // m * m


def _cdiv(a, b):
    return (a + b - 1) // b


def _scl_kernel(labq_ref, labk_ref, fq_ref, fk_ref, msim_ref, logden_ref,
                m_ref, den_ref, *, n_valid, block_q, block_k, key_padded):
    qi = pl.program_id(0)
    ki = pl.program_id(1)
    nk = pl.num_programs(1)

    # ---- init (once per anchor block): reset resident accumulators.
    @pl.when(ki == 0)
    def _init():
        m_ref[...] = jnp.full_like(m_ref, -1e30)
        den_ref[...] = jnp.zeros_like(den_ref)
        msim_ref[...] = jnp.zeros_like(msim_ref)

    # ---- (tq, tk) logit tile on the MXU.  Anchors already carry the
    #      1/temperature scale and keys are already normalized, so there is no
    #      per-step normalization / scaling VPU work.  Contract directly on
    #      the feature axis (no transposed key copy).
    sim = lax.dot_general(fq_ref[...], fk_ref[...],
                          (((1,), (1,)), ((), ())),
                          preferred_element_type=jnp.float32)

    pos_lab = labq_ref[...] == labk_ref[...]

    def _accumulate(sim_v, pos):
        # Online (max-shifted) log-sum-exp + positive-similarity sum.
        m_old = m_ref[...]
        m_new = jnp.maximum(m_old, jnp.max(sim_v, axis=1, keepdims=True))
        den_ref[...] = (den_ref[...] * jnp.exp(m_old - m_new)
                        + jnp.sum(jnp.exp(sim_v - m_new), axis=1, keepdims=True))
        m_ref[...] = m_new
        msim_ref[...] += jnp.sum(jnp.where(pos, sim_v, 0.0), axis=1,
                                 keepdims=True)

    # ---- masking is only needed on tiles that contain the diagonal or padded
    #      key columns; interior tiles take the unmasked fast path.
    has_diag = jnp.logical_and(qi * block_q < (ki + 1) * block_k,
                               ki * block_k < (qi + 1) * block_q)
    if key_padded:
        needs_mask = jnp.logical_or(has_diag, ki == nk - 1)
    else:
        needs_mask = has_diag

    @pl.when(needs_mask)
    def _edge_tile():
        row = qi * block_q + lax.broadcasted_iota(jnp.int32, sim.shape, 0)
        col = ki * block_k + lax.broadcasted_iota(jnp.int32, sim.shape, 1)
        valid = jnp.logical_and(col < n_valid, row != col)
        _accumulate(jnp.where(valid, sim, jnp.float32(-1e30)),
                    jnp.logical_and(valid, pos_lab))

    @pl.when(jnp.logical_not(needs_mask))
    def _interior_tile():
        _accumulate(sim, pos_lab)

    # ---- finalize: per-anchor log denominator  log(sum_{j!=i} e^{sim_ij}+1e-8).
    #      The exp(-m) clamp only differs from the reference on degenerate /
    #      padded rows, which are sliced off outside the kernel.
    @pl.when(ki == nk - 1)
    def _finalize():
        m = m_ref[...]
        logden_ref[...] = m + jnp.log(
            den_ref[...] + 1e-8 * jnp.exp(jnp.minimum(-m, 80.0)))


def supervised_contrastive_loss(features, labels, temperature=0.07,
                                base_temperature=0.07, *, block_q=512,
                                block_k=1024, mxu_dtype=jnp.bfloat16,
                                key_buffer_count=2):
    """features: [B, D] float, labels: [B] int  ->  scalar float32 loss.

    mxu_dtype=bf16 is the production path; float32 is test-only.
    key_buffer_count>2 requests deeper pipelining of the key stream.
    """
    assert block_q % 32 == 0 and block_k % 128 == 0
    B, D = features.shape
    d_pad = _round_up(D, 128)
    itemsize = jnp.dtype(mxu_dtype).itemsize

    # ---- tile sizes --------------------------------------------------------
    tq = min(block_q, _round_up(B, 32))
    # v7x megacore: if there is only one anchor block and B is large enough,
    # split it so both TensorCores get work on the "parallel" axis.
    if tq == _round_up(B, 32) and B >= 256:
        tq = _round_up(_cdiv(B, 2), 32)
    tk = min(block_k, _round_up(B, 128))

    # ---- VMEM budget (v7x: 64 MiB physical; default scoped limits 16-32 MiB).
    try:
        vmem_cap = pltpu.get_tpu_info().vmem_capacity_bytes
    except Exception:
        vmem_cap = 64 << 20                       # conservative (v7x per-TC)
    budget = max(min(vmem_cap - (16 << 20), 100 << 20), 32 << 20)

    def _vmem_est(tq_, tk_):
        return (2 * tq_ * d_pad * itemsize                      # fq double buf
                + max(2, key_buffer_count) * tk_ * d_pad * itemsize  # fk stream
                + 2 * (tq_ + tk_) * 4                           # labels
                + 2 * 2 * tq_ * 4                               # outputs
                + 2 * tq_ * 4 + (256 << 10))                    # scratch + slack

    while _vmem_est(tq, tk) > budget and tk > 128:
        tk = max(128, _round_up(tk // 2, 128))
    while _vmem_est(tq, tk) > budget and tq > 64:
        tq //= 2
    # TODO(synk): tile the feature axis too for extremely large D instead of
    # only shrinking tq / tk.

    bq = _round_up(B, tq)
    bk = _round_up(B, tk)
    nq, nk = bq // tq, bk // tk

    # ---- one-shot XLA prep: L2-normalize, fold 1/T into anchors, cast -------
    inv_temp = 1.0 / float(temperature)
    f32 = features.astype(jnp.float32)
    # F.normalize(p=2, dim=1, eps=1e-12): x / max(||x||, 1e-12)
    inv_norm = lax.rsqrt(jnp.maximum(jnp.sum(f32 * f32, axis=1, keepdims=True),
                                     1e-24))
    fn = f32 * inv_norm
    fq = jnp.pad((fn * inv_temp).astype(mxu_dtype),
                 ((0, bq - B), (0, d_pad - D)))
    fk = jnp.pad(fn.astype(mxu_dtype), ((0, bk - B), (0, d_pad - D)))

    lab = labels.astype(jnp.int32)
    labq = jnp.pad(lab, (0, bq - B), constant_values=-1).reshape(bq, 1)
    labk = jnp.pad(lab, (0, bk - B), constant_values=-1).reshape(1, bk)

    # ---- key-stream BlockSpec (optionally >2-deep buffered) -----------------
    fk_spec = pl.BlockSpec((tk, d_pad), lambda qi, ki: (ki, 0))
    if key_buffer_count > 2:
        try:
            fk_spec = pl.BlockSpec((tk, d_pad), lambda qi, ki: (ki, 0),
                                   pipeline_mode=pl.Buffered(key_buffer_count))
        except TypeError:
            pass  # older jax: fall back to default double buffering

    kernel = functools.partial(
        _scl_kernel, n_valid=B, block_q=tq, block_k=tk, key_padded=bk > B)

    cost = pl.CostEstimate(
        flops=2 * bq * bk * d_pad,
        transcendentals=bq * bk,
        bytes_accessed=(nq * bk * d_pad + bq * d_pad) * itemsize
        + (nq * bk + bq) * 4 + 2 * bq * 4)

    msim, logden = pl.pallas_call(
        kernel,
        out_shape=(jax.ShapeDtypeStruct((bq, 1), jnp.float32),
                   jax.ShapeDtypeStruct((bq, 1), jnp.float32)),
        grid_spec=pltpu.PrefetchScalarGridSpec(
            num_scalar_prefetch=0,
            grid=(nq, nk),
            in_specs=[
                pl.BlockSpec((tq, 1), lambda qi, ki: (qi, 0)),      # labels (col)
                pl.BlockSpec((1, tk), lambda qi, ki: (0, ki)),      # labels (row)
                pl.BlockSpec((tq, d_pad), lambda qi, ki: (qi, 0)),  # anchors (pre-scaled)
                fk_spec,                                            # keys (normalized)
            ],
            out_specs=[
                pl.BlockSpec((tq, 1), lambda qi, ki: (qi, 0)),      # sum(mask*sim)
                pl.BlockSpec((tq, 1), lambda qi, ki: (qi, 0)),      # log denominator
            ],
            scratch_shapes=[
                pltpu.VMEM((tq, 1), jnp.float32),    # running row max
                pltpu.VMEM((tq, 1), jnp.float32),    # running sum exp
            ],
        ),
        compiler_params=pltpu.CompilerParams(
            dimension_semantics=("parallel", "arbitrary"),
            vmem_limit_bytes=int(max(budget, _vmem_est(tq, tk)))),
        cost_estimate=cost,
    )(labq, labk, fq, fk)

    # ---- tiny XLA epilogue: positive counts, divide, mean, scale ------------
    # cnt_i = (# samples sharing label_i) - 1.  The O(B^2) boolean compare is
    # negligible next to the B^2*D kernel matmul (swap to bincount/segment_sum
    # for very large B with small non-negative labels).
    cnt = jnp.sum(lab[:, None] == lab[None, :], axis=1).astype(jnp.float32) - 1.0
    mean_log_prob_pos = (msim[:B, 0] - cnt * logden[:B, 0]) / (cnt + 1e-8)
    return -(temperature / base_temperature) * jnp.mean(mean_log_prob_pos)


def _reference(features, labels, temperature=0.07, base_temperature=0.07):
    """Plain-JAX port of the PyTorch module (f32, HIGHEST-precision matmul)."""
    f = features.astype(jnp.float32)
    fn = f / jnp.maximum(jnp.linalg.norm(f, axis=1, keepdims=True), 1e-12)
    sim = jnp.dot(fn, fn.T, precision=jax.lax.Precision.HIGHEST) / temperature
    B = f.shape[0]
    logits_mask = 1.0 - jnp.eye(B, dtype=jnp.float32)
    label_mask = (labels[:, None] == labels[None, :]).astype(jnp.float32)
    mask = label_mask * logits_mask
    exp_logits = jnp.exp(sim) * logits_mask
    log_probs = sim - jnp.log(exp_logits.sum(1, keepdims=True) + 1e-8)
    mlpp = (mask * log_probs).sum(1) / (mask.sum(1) + 1e-8)
    return -(temperature / base_temperature) * mlpp.mean()


if __name__ == "__main__":
    key = jax.random.PRNGKey(0)
    k1, k2, k3, k4 = jax.random.split(key, 4)

    # Case 1: tiny shape (single tile after padding, masked path only).
    B1, D1 = 8, 32
    f1 = jax.random.normal(k1, (B1, D1), dtype=jnp.float32)
    l1 = jax.random.randint(k2, (B1,), 0, 4, dtype=jnp.int32)
    loss1 = supervised_contrastive_loss(f1, l1)
    jax.block_until_ready(loss1)
    ref1 = _reference(f1, l1)
    assert jnp.allclose(loss1, ref1, atol=5e-2, rtol=5e-2), (loss1, ref1)       # bf16 MXU
    loss1_f32 = supervised_contrastive_loss(f1, l1, mxu_dtype=jnp.float32)
    assert jnp.allclose(loss1_f32, ref1, atol=1e-2, rtol=1e-2), (loss1_f32, ref1)

    # Case 2: multi-block (4 x 2) grid with padding on both axes; exercises the
    # interior fast path (tiles with no diagonal / no padded columns).
    B2, D2 = 200, 32
    f2 = jax.random.normal(k3, (B2, D2), dtype=jnp.float32)
    l2 = jax.random.randint(k4, (B2,), 0, 10, dtype=jnp.int32)
    loss2 = supervised_contrastive_loss(f2, l2, block_q=64, block_k=128)
    jax.block_until_ready(loss2)
    ref2 = _reference(f2, l2)
    assert jnp.allclose(loss2, ref2, atol=5e-2, rtol=5e-2), (loss2, ref2)       # bf16 MXU
    loss2_f32 = supervised_contrastive_loss(f2, l2, block_q=64, block_k=128,
                                            mxu_dtype=jnp.float32)
    assert jnp.allclose(loss2_f32, ref2, atol=1e-2, rtol=1e-2), (loss2_f32, ref2)

    # Case 3: same data, default (production) tile sizes.
    loss3 = supervised_contrastive_loss(f2, l2)
    jax.block_until_ready(loss3)
    assert jnp.allclose(loss3, ref2, atol=5e-2, rtol=5e-2), (loss3, ref2)

    print("KERNEL_OK")
</pallas_src>

<mosaic_0001>
module attributes {stable_mosaic.version = 11 : i64} {
  func.func @_scl_kernel(%arg0: i32, %arg1: i32, %arg2: memref<32x1xi32, #tpu.memory_space<vmem>>, %arg3: memref<1x128xi32, #tpu.memory_space<vmem>>, %arg4: memref<32x128xbf16, #tpu.memory_space<vmem>>, %arg5: memref<128x128xbf16, #tpu.memory_space<vmem>>, %arg6: memref<32x1xf32, #tpu.memory_space<vmem>>, %arg7: memref<32x1xf32, #tpu.memory_space<vmem>>, %arg8: memref<32x1xf32, #tpu.memory_space<vmem>>, %arg9: memref<32x1xf32, #tpu.memory_space<vmem>>) attributes {dimension_semantics = [#tpu.dimension_semantics<parallel>, #tpu.dimension_semantics<arbitrary>], iteration_bounds = array<i64: 1, 1>, scalar_prefetch = 0 : i64, scratch_operands = 2 : i64, tpu.core_type = #tpu.core_type<tc>, window_params = [{transform_indices = @transform_0, window_bounds = array<i64: 32, 1>}, {transform_indices = @transform_1, window_bounds = array<i64: 1, 128>}, {transform_indices = @transform_2, window_bounds = array<i64: 32, 128>}, {transform_indices = @transform_3, window_bounds = array<i64: 128, 128>}, {transform_indices = @transform_4, window_bounds = array<i64: 32, 1>}, {transform_indices = @transform_5, window_bounds = array<i64: 32, 1>}]} {
    %c0_i32 = arith.constant 0 : i32
    %0 = arith.cmpi eq, %arg1, %c0_i32 : i32
    %1 = arith.extui %0 : i1 to i32
    %c0_i32_0 = arith.constant 0 : i32
    %2 = arith.cmpi ne, %1, %c0_i32_0 : i32
    scf.if %2 {
      %cst_16 = arith.constant -1.000000e+30 : f32
      %30 = vector.broadcast %cst_16 : f32 to vector<32x1xf32>
      %c0_17 = arith.constant 0 : index
      %c0_18 = arith.constant 0 : index
      %31 = vector.load %arg8[%c0_17, %c0_18] : memref<32x1xf32, #tpu.memory_space<vmem>>, vector<32x1xf32>
      tpu.vector_store %arg8[%c0_17, %c0_18], %30 {strides = array<i32>} : memref<32x1xf32, #tpu.memory_space<vmem>>, vector<32x1xf32>,
      %cst_19 = arith.constant 0.000000e+00 : f32
      %32 = vector.broadcast %cst_19 : f32 to vector<32x1xf32>
      %c0_20 = arith.constant 0 : index
      %c0_21 = arith.constant 0 : index
      %33 = vector.load %arg9[%c0_20, %c0_21] : memref<32x1xf32, #tpu.memory_space<vmem>>, vector<32x1xf32>
      tpu.vector_store %arg9[%c0_20, %c0_21], %32 {strides = array<i32>} : memref<32x1xf32, #tpu.memory_space<vmem>>, vector<32x1xf32>,
      %cst_22 = arith.constant 0.000000e+00 : f32
      %34 = vector.broadcast %cst_22 : f32 to vector<32x1xf32>
      %c0_23 = arith.constant 0 : index
      %c0_24 = arith.constant 0 : index
      %35 = vector.load %arg6[%c0_23, %c0_24] : memref<32x1xf32, #tpu.memory_space<vmem>>, vector<32x1xf32>
      tpu.vector_store %arg6[%c0_23, %c0_24], %34 {strides = array<i32>} : memref<32x1xf32, #tpu.memory_space<vmem>>, vector<32x1xf32>,
    } else {
    }
    %c0 = arith.constant 0 : index
    %c0_1 = arith.constant 0 : index
    %3 = vector.load %arg4[%c0, %c0_1] : memref<32x128xbf16, #tpu.memory_space<vmem>>, vector<32x128xbf16>
    %c0_2 = arith.constant 0 : index
    %c0_3 = arith.constant 0 : index
    %4 = vector.load %arg5[%c0_2, %c0_3] : memref<128x128xbf16, #tpu.memory_space<vmem>>, vector<128x128xbf16>
    %cst = arith.constant dense<0.000000e+00> : vector<32x128xf32>
    %5 = tpu.matmul %3, %4, %cst {dimension_numbers = #tpu.dot_dimension_numbers<[1], [1], [0], [0], [0, 0, 1, 0], [], []>} : vector<32x128xbf16>, vector<128x128xbf16>, vector<32x128xf32> -> vector<32x128xf32>
    %c0_4 = arith.constant 0 : index
    %c0_5 = arith.constant 0 : index
    %6 = vector.load %arg2[%c0_4, %c0_5] : memref<32x1xi32, #tpu.memory_space<vmem>>, vector<32x1xi32>
    %c0_6 = arith.constant 0 : index
    %c0_7 = arith.constant 0 : index
    %7 = vector.load %arg3[%c0_6, %c0_7] : memref<1x128xi32, #tpu.memory_space<vmem>>, vector<1x128xi32>
    %8 = vector.broadcast %6 : vector<32x1xi32> to vector<32x128xi32>
    %9 = vector.broadcast %7 : vector<1x128xi32> to vector<32x128xi32>
    %10 = arith.cmpi eq, %8, %9 : vector<32x128xi32>
    %c32_i32 = arith.constant 32 : i32
    %11 = arith.muli %arg0, %c32_i32 : i32
    %c1_i32 = arith.constant 1 : i32
    %12 = arith.addi %arg1, %c1_i32 : i32
    %c128_i32 = arith.constant 128 : i32
    %13 = arith.muli %12, %c128_i32 : i32
    %14 = arith.cmpi slt, %11, %13 : i32
    %c128_i32_8 = arith.constant 128 : i32
    %15 = arith.muli %arg1, %c128_i32_8 : i32
    %c1_i32_9 = arith.constant 1 : i32
    %16 = arith.addi %arg0, %c1_i32_9 : i32
    %c32_i32_10 = arith.constant 32 : i32
    %17 = arith.muli %16, %c32_i32_10 : i32
    %18 = arith.cmpi slt, %15, %17 : i32
    %19 = arith.andi %14, %18 : i1
    %c0_i32_11 = arith.constant 0 : i32
    %20 = arith.cmpi eq, %arg1, %c0_i32_11 : i32
    %21 = arith.ori %19, %20 : i1
    %22 = arith.extui %21 : i1 to i32
    %c0_i32_12 = arith.constant 0 : i32
    %23 = arith.cmpi ne, %22, %c0_i32_12 : i32
    scf.if %23 {
      %c32_i32_16 = arith.constant 32 : i32
      %30 = arith.muli %arg0, %c32_i32_16 : i32
      %31 = tpu.iota {dimensions = array<i32: 0>} : vector<32x128xi32>
      %32 = vector.broadcast %30 : i32 to vector<32x128xi32>
      %33 = arith.addi %32, %31 : vector<32x128xi32>
      %c128_i32_17 = arith.constant 128 : i32
      %34 = arith.muli %arg1, %c128_i32_17 : i32
      %35 = tpu.iota {dimensions = array<i32: 1>} : vector<32x128xi32>
      %36 = vector.broadcast %34 : i32 to vector<32x128xi32>
      %37 = arith.addi %36, %35 : vector<32x128xi32>
      %c8_i32 = arith.constant 8 : i32
      %38 = vector.broadcast %c8_i32 : i32 to vector<32x128xi32>
      %39 = arith.cmpi slt, %37, %38 : vector<32x128xi32>
      %40 = arith.cmpi ne, %33, %37 : vector<32x128xi32>
      %41 = arith.andi %39, %40 : vector<32x128xi1>
      %cst_18 = arith.constant -1.000000e+30 : f32
      %42 = vector.broadcast %cst_18 : f32 to vector<32x128xf32>
      %43 = arith.select %41, %5, %42 : vector<32x128xi1>, vector<32x128xf32>
      %44 = arith.andi %41, %10 : vector<32x128xi1>
      %c0_19 = arith.constant 0 : index
      %c0_20 = arith.constant 0 : index
      %45 = vector.load %arg8[%c0_19, %c0_20] : memref<32x1xf32, #tpu.memory_space<vmem>>, vector<32x1xf32>
      %cst_21 = arith.constant dense<0xFF800000> : vector<32xf32>
      %46 = vector.multi_reduction <maximumf>, %43, %cst_21 [1] : vector<32x128xf32> to vector<32xf32>
      %47 = vector.shape_cast %46 : vector<32xf32> to vector<32x1xf32>
      %48 = arith.maximumf %45, %47 : vector<32x1xf32>
      %c0_22 = arith.constant 0 : index
      %c0_23 = arith.constant 0 : index
      %49 = vector.load %arg9[%c0_22, %c0_23] : memref<32x1xf32, #tpu.memory_space<vmem>>, vector<32x1xf32>
      %50 = arith.subf %45, %48 : vector<32x1xf32>
      %51 = math.exp %50 : vector<32x1xf32>
      %52 = arith.mulf %49, %51 : vector<32x1xf32>
      %53 = vector.broadcast %48 : vector<32x1xf32> to vector<32x128xf32>
      %54 = arith.subf %43, %53 : vector<32x128xf32>
      %55 = math.exp %54 : vector<32x128xf32>
      %cst_24 = arith.constant dense<0.000000e+00> : vector<32xf32>
      %56 = vector.multi_reduction <add>, %55, %cst_24 [1] : vector<32x128xf32> to vector<32xf32>
      %57 = vector.shape_cast %56 : vector<32xf32> to vector<32x1xf32>
      %58 = arith.addf %52, %57 : vector<32x1xf32>
      %c0_25 = arith.constant 0 : index
      %c0_26 = arith.constant 0 : index
      %59 = vector.load %arg9[%c0_25, %c0_26] : memref<32x1xf32, #tpu.memory_space<vmem>>, vector<32x1xf32>
      tpu.vector_store %arg9[%c0_25, %c0_26], %58 {strides = array<i32>} : memref<32x1xf32, #tpu.memory_space<vmem>>, vector<32x1xf32>,
      %c0_27 = arith.constant 0 : index
      %c0_28 = arith.constant 0 : index
      %60 = vector.load %arg8[%c0_27, %c0_28] : memref<32x1xf32, #tpu.memory_space<vmem>>, vector<32x1xf32>
      tpu.vector_store %arg8[%c0_27, %c0_28], %48 {strides = array<i32>} : memref<32x1xf32, #tpu.memory_space<vmem>>, vector<32x1xf32>,
      %c0_29 = arith.constant 0 : index
      %c0_30 = arith.constant 0 : index
      %61 = vector.load %arg6[%c0_29, %c0_30] : memref<32x1xf32, #tpu.memory_space<vmem>>, vector<32x1xf32>
      %cst_31 = arith.constant 0.000000e+00 : f32
      %62 = vector.broadcast %cst_31 : f32 to vector<32x128xf32>
      %63 = arith.select %44, %43, %62 : vector<32x128xi1>, vector<32x128xf32>
      %cst_32 = arith.constant dense<0.000000e+00> : vector<32xf32>
      %64 = vector.multi_reduction <add>, %63, %cst_32 [1] : vector<32x128xf32> to vector<32xf32>
      %65 = vector.shape_cast %64 : vector<32xf32> to vector<32x1xf32>
      %66 = arith.addf %61, %65 : vector<32x1xf32>
      %c0_33 = arith.constant 0 : index
      %c0_34 = arith.constant 0 : index
      %67 = vector.load %arg6[%c0_33, %c0_34] : memref<32x1xf32, #tpu.memory_space<vmem>>, vector<32x1xf32>
      tpu.vector_store %arg6[%c0_33, %c0_34], %66 {strides = array<i32>} : memref<32x1xf32, #tpu.memory_space<vmem>>, vector<32x1xf32>,
    } else {
    }
    %true = arith.constant true
    %24 = arith.xori %21, %true : i1
    %25 = arith.extui %24 : i1 to i32
    %c0_i32_13 = arith.constant 0 : i32
    %26 = arith.cmpi ne, %25, %c0_i32_13 : i32
    scf.if %26 {
      %c0_16 = arith.constant 0 : index
      %c0_17 = arith.constant 0 : index
      %30 = vector.load %arg8[%c0_16, %c0_17] : memref<32x1xf32, #tpu.memory_space<vmem>>, vector<32x1xf32>
      %cst_18 = arith.constant dense<0xFF800000> : vector<32xf32>
      %31 = vector.multi_reduction <maximumf>, %5, %cst_18 [1] : vector<32x128xf32> to vector<32xf32>
      %32 = vector.shape_cast %31 : vector<32xf32> to vector<32x1xf32>
      %33 = arith.maximumf %30, %32 : vector<32x1xf32>
      %c0_19 = arith.constant 0 : index
      %c0_20 = arith.constant 0 : index
      %34 = vector.load %arg9[%c0_19, %c0_20] : memref<32x1xf32, #tpu.memory_space<vmem>>, vector<32x1xf32>
      %35 = arith.subf %30, %33 : vector<32x1xf32>
      %36 = math.exp %35 : vector<32x1xf32>
      %37 = arith.mulf %34, %36 : vector<32x1xf32>
      %38 = vector.broadcast %33 : vector<32x1xf32> to vector<32x128xf32>
      %39 = arith.subf %5, %38 : vector<32x128xf32>
      %40 = math.exp %39 : vector<32x128xf32>
      %cst_21 = arith.constant dense<0.000000e+00> : vector<32xf32>
      %41 = vector.multi_reduction <add>, %40, %cst_21 [1] : vector<32x128xf32> to vector<32xf32>
      %42 = vector.shape_cast %41 : vector<32xf32> to vector<32x1xf32>
      %43 = arith.addf %37, %42 : vector<32x1xf32>
      %c0_22 = arith.constant 0 : index
      %c0_23 = arith.constant 0 : index
      %44 = vector.load %arg9[%c0_22, %c0_23] : memref<32x1xf32, #tpu.memory_space<vmem>>, vector<32x1xf32>
      tpu.vector_store %arg9[%c0_22, %c0_23], %43 {strides = array<i32>} : memref<32x1xf32, #tpu.memory_space<vmem>>, vector<32x1xf32>,
      %c0_24 = arith.constant 0 : index
      %c0_25 = arith.constant 0 : index
      %45 = vector.load %arg8[%c0_24, %c0_25] : memref<32x1xf32, #tpu.memory_space<vmem>>, vector<32x1xf32>
      tpu.vector_store %arg8[%c0_24, %c0_25], %33 {strides = array<i32>} : memref<32x1xf32, #tpu.memory_space<vmem>>, vector<32x1xf32>,
      %c0_26 = arith.constant 0 : index
      %c0_27 = arith.constant 0 : index
      %46 = vector.load %arg6[%c0_26, %c0_27] : memref<32x1xf32, #tpu.memory_space<vmem>>, vector<32x1xf32>
      %cst_28 = arith.constant 0.000000e+00 : f32
      %47 = vector.broadcast %cst_28 : f32 to vector<32x128xf32>
      %48 = arith.select %10, %5, %47 : vector<32x128xi1>, vector<32x128xf32>
      %cst_29 = arith.constant dense<0.000000e+00> : vector<32xf32>
      %49 = vector.multi_reduction <add>, %48, %cst_29 [1] : vector<32x128xf32> to vector<32xf32>
      %50 = vector.shape_cast %49 : vector<32xf32> to vector<32x1xf32>
      %51 = arith.addf %46, %50 : vector<32x1xf32>
      %c0_30 = arith.constant 0 : index
      %c0_31 = arith.constant 0 : index
      %52 = vector.load %arg6[%c0_30, %c0_31] : memref<32x1xf32, #tpu.memory_space<vmem>>, vector<32x1xf32>
      tpu.vector_store %arg6[%c0_30, %c0_31], %51 {strides = array<i32>} : memref<32x1xf32, #tpu.memory_space<vmem>>, vector<32x1xf32>,
    } else {
    }
    %c0_i32_14 = arith.constant 0 : i32
    %27 = arith.cmpi eq, %arg1, %c0_i32_14 : i32
    %28 = arith.extui %27 : i1 to i32
    %c0_i32_15 = arith.constant 0 : i32
    %29 = arith.cmpi ne, %28, %c0_i32_15 : i32
    scf.if %29 {
      %c0_16 = arith.constant 0 : index
      %c0_17 = arith.constant 0 : index
      %30 = vector.load %arg8[%c0_16, %c0_17] : memref<32x1xf32, #tpu.memory_space<vmem>>, vector<32x1xf32>
      %c0_18 = arith.constant 0 : index
      %c0_19 = arith.constant 0 : index
      %31 = vector.load %arg9[%c0_18, %c0_19] : memref<32x1xf32, #tpu.memory_space<vmem>>, vector<32x1xf32>
      %cst_20 = arith.constant 0.000000e+00 : f32
      %32 = vector.broadcast %cst_20 : f32 to vector<32x1xf32>
      %33 = arith.subf %32, %30 : vector<32x1xf32>
      %cst_21 = arith.constant 8.000000e+01 : f32
      %34 = vector.broadcast %cst_21 : f32 to vector<32x1xf32>
      %35 = arith.minimumf %33, %34 : vector<32x1xf32>
      %36 = math.exp %35 : vector<32x1xf32>
      %cst_22 = arith.constant 9.99999993E-9 : f32
      %37 = vector.broadcast %cst_22 : f32 to vector<32x1xf32>
      %38 = arith.mulf %37, %36 : vector<32x1xf32>
      %39 = arith.addf %31, %38 : vector<32x1xf32>
      %40 = math.log %39 : vector<32x1xf32>
      %41 = arith.addf %30, %40 : vector<32x1xf32>
      %c0_23 = arith.constant 0 : index
      %c0_24 = arith.constant 0 : index
      %42 = vector.load %arg7[%c0_23, %c0_24] : memref<32x1xf32, #tpu.memory_space<vmem>>, vector<32x1xf32>
      tpu.vector_store %arg7[%c0_23, %c0_24], %41 {strides = array<i32>} : memref<32x1xf32, #tpu.memory_space<vmem>>, vector<32x1xf32>,
    } else {
    }
    return
  }
  func.func @transform_0(%arg0: i32, %arg1: i32) -> (i32, i32) {
    %c0_i32 = arith.constant 0 : i32
    %c0_i32_0 = arith.constant 0 : i32
    return %arg0, %c0_i32 : i32, i32
  }
  func.func @transform_1(%arg0: i32, %arg1: i32) -> (i32, i32) {
    %c0_i32 = arith.constant 0 : i32
    %c0_i32_0 = arith.constant 0 : i32
    return %c0_i32, %arg1 : i32, i32
  }
  func.func @transform_2(%arg0: i32, %arg1: i32) -> (i32, i32) {
    %c0_i32 = arith.constant 0 : i32
    %c0_i32_0 = arith.constant 0 : i32
    return %arg0, %c0_i32 : i32, i32
  }
  func.func @transform_3(%arg0: i32, %arg1: i32) -> (i32, i32) {
    %c0_i32 = arith.constant 0 : i32
    %c0_i32_0 = arith.constant 0 : i32
    return %arg1, %c0_i32 : i32, i32
  }
  func.func @transform_4(%arg0: i32, %arg1: i32) -> (i32, i32) {
    %c0_i32 = arith.constant 0 : i32
    %c0_i32_0 = arith.constant 0 : i32
    return %arg0, %c0_i32 : i32, i32
  }
  func.func @transform_5(%arg0: i32, %arg1: i32) -> (i32, i32) {
    %c0_i32 = arith.constant 0 : i32
    %c0_i32_0 = arith.constant 0 : i32
    return %arg0, %c0_i32 : i32, i32
  }
}

</mosaic_0001>

<llo_original>
// kernel: tpu_custom_call.1
$region0: #{tpu_custom_call.1}
  #allocation0 [shape = 'u32[]', space=smem, size = 0x4, offset = 0x4, fixed_abs, tag = 'smem constant byte address 0x4 - core index']
  #allocation1 [shape = 'u32[144,128]{1,0:T(1,128)}', space=vmem, size = 0x12000, scoped, tag = 'internal scratch']
  #allocation2 [shape = 'f32[32,1]{1,0:T(8,128)}', space=vmem, size = 0x4000, scoped, tag = 'scratch operand']
  #allocation3 [shape = 'f32[32,1]{1,0:T(8,128)}', space=vmem, size = 0x4000, scoped, tag = 'scratch operand']
  %s0 = inlined_call_operand.vmem [shape: s32[32,1], index: 0, kind: input, shape index: {}]
  %s1 = inlined_call_operand.vmem [shape: s32[1,128], index: 1, kind: input, shape index: {}]
  %s2 = inlined_call_operand.vmem [shape: bf16[32,128], index: 2, kind: input, shape index: {}]
  %s3 = inlined_call_operand.hbm [shape: bf16[128,128], index: 3, kind: input, shape index: {}]
  %s4 = inlined_call_operand.vmem [shape: f32[32,1], index: 4, kind: output, shape index: {0}]
  %s5 = inlined_call_operand.vmem [shape: f32[32,1], index: 5, kind: output, shape index: {1}]
  %6 = xla_tuple %s4, %s5
  %s7 = sld [smem:[#allocation0]]
  $region54: #{tpu_custom_call.1} parent=0
    _
  %s9 = ssub.s32 1, %s7
  %s10 = scalar_select 0, %s9, %s7
  $region1: #{tpu_custom_call.1} parent=0
    #allocation4 [shape = 'u8[32768]{0}', space=vmem, size = 0x8000, scoped, tag = 'input window, operand 3, single buffered']
    #allocation5 [shape = 's32[1]{0}', space=sflag, size = 0x4, scoped, tag = 'scoped memory for tpu_custom_call.1']
    %11 = vsyncpa [#allocation5], 0
    // Predicated region
    $region2: #{tpu_custom_call.1} parent=1 // pred_check
      _
    $region3: #{tpu_custom_call.1} parent=1 // pred_check_branch
      %13 = sbr.rel (0) target = $region5
    $region4: #{tpu_custom_call.1} parent=1 // pred_region
      _
    $region5: #{tpu_custom_call.1} parent=1 // pred_fallthru
      _
    // Predicated region
    $region6: #{tpu_custom_call.1} parent=1 // pred_check
      _
    $region7: #{tpu_custom_call.1} parent=1 // pred_check_branch
      %15 = sbr.rel (0) target = $region9
    $region8: #{tpu_custom_call.1} parent=1 // pred_region
      _
    $region9: #{tpu_custom_call.1} parent=1 // pred_fallthru
      _
    // Predicated region
    $region10: #{tpu_custom_call.1} parent=1 // pred_check
      _
    $region11: #{tpu_custom_call.1} parent=1 // pred_check_branch
      %17 = sbr.rel (0) target = $region13
    $region12: #{tpu_custom_call.1} parent=1 // pred_region
      _
    $region13: #{tpu_custom_call.1} parent=1 // pred_fallthru
      _
    // Predicated region
    $region14: #{tpu_custom_call.1} parent=1 // pred_check
      _
    $region15: #{tpu_custom_call.1} parent=1 // pred_check_branch
      %19 = sbr.rel (0) target = $region17
    $region16: #{tpu_custom_call.1} parent=1 // pred_region
      %s21 = ssub.s32 1024, 1024
      %22 = vsyncadd [#allocation5], %s21
      %s23 = sshll.u32 [#allocation4], 4
      %s24 = int_to_ptr.vmem [resolvable:$true] %s23
      %29 = dma.hbm_to_vmem [thread:$0]  %s3, 1024, %s24, [#allocation5], 64, 64, 4
    $region17: #{tpu_custom_call.1} parent=1 // pred_fallthru
      _
    // Predicated region
    $region18: #{tpu_custom_call.1} parent=1 // pred_check
      _
    $region19: #{tpu_custom_call.1} parent=1 // pred_check_branch
      %31 = sbr.rel (0) target = $region21
    $region20: #{tpu_custom_call.1} parent=1 // pred_region
      %32 = dma.done [#allocation5], 1024
    $region21: #{tpu_custom_call.1} parent=1 // pred_fallthru
      _
    %p34 = scmp.eq.s32.totalorder 0, 0
    // Predicated region
    $region22: #{tpu_custom_call.1} parent=1 // pred_check
      %p35 = pneg %p34
    $region23: #{tpu_custom_call.1} parent=1 // pred_check_branch
      %37 = sbr.rel (%p35) target = $region25
    $region24: #{tpu_custom_call.1} parent=1 // pred_region
      %vm38 = vcmask 7168
      %39 = vst.msk [vmem:[#allocation2] sm:$0xff] %vm38, -1e+30
      %40 = vst.msk [vmem:[#allocation2 + $0x8] sm:$0xff] %vm38, -1e+30
      %41 = vst.msk [vmem:[#allocation2 + $0x10] sm:$0xff] %vm38, -1e+30
      %42 = vst.msk [vmem:[#allocation2 + $0x18] sm:$0xff] %vm38, -1e+30
      %43 = vst.msk [vmem:[#allocation3] sm:$0xff] %vm38, 0.0
      %44 = vst.msk [vmem:[#allocation3 + $0x8] sm:$0xff] %vm38, 0.0
      %45 = vst.msk [vmem:[#allocation3 + $0x10] sm:$0xff] %vm38, 0.0
      %46 = vst.msk [vmem:[#allocation3 + $0x18] sm:$0xff] %vm38, 0.0
      %47 = vst.msk [vmem:[%s4] sm:$0xff] %vm38, 0.0
      %48 = vst.msk [vmem:[%s4 + $0x8] sm:$0xff] %vm38, 0.0
      %49 = vst.msk [vmem:[%s4 + $0x10] sm:$0xff] %vm38, 0.0
      %50 = vst.msk [vmem:[%s4 + $0x18] sm:$0xff] %vm38, 0.0
    $region25: #{tpu_custom_call.1} parent=1 // pred_fallthru
      _
    %v51 = vld [vmem:[%s2] sm:$0xf]
    %v52 = vld [vmem:[%s2 + $0x4] sm:$0xf]
    %v53 = vld [vmem:[%s2 + $0x8] sm:$0xf]
    %v54 = vld [vmem:[%s2 + $0xc] sm:$0xf]
    %v55 = vld [vmem:[#allocation4] sm:$0xf]
    %v56 = vld [vmem:[#allocation4 + $0x4] sm:$0xf]
    %v57 = vld [vmem:[#allocation4 + $0x8] sm:$0xf]
    %v58 = vld [vmem:[#allocation4 + $0xc] sm:$0xf]
    %v59 = vld [vmem:[#allocation4 + $0x10] sm:$0xf]
    %v60 = vld [vmem:[#allocation4 + $0x14] sm:$0xf]
    %v61 = vld [vmem:[#allocation4 + $0x18] sm:$0xf]
    %v62 = vld [vmem:[#allocation4 + $0x1c] sm:$0xf]
    %v63 = vld [vmem:[#allocation4 + $0x20] sm:$0xf]
    %v64 = vld [vmem:[#allocation4 + $0x24] sm:$0xf]
    %v65 = vld [vmem:[#allocation4 + $0x28] sm:$0xf]
    %v66 = vld [vmem:[#allocation4 + $0x2c] sm:$0xf]
    %v67 = vld [vmem:[#allocation4 + $0x30] sm:$0xf]
    %v68 = vld [vmem:[#allocation4 + $0x34] sm:$0xf]
    %v69 = vld [vmem:[#allocation4 + $0x38] sm:$0xf]
    %v70 = vld [vmem:[#allocation4 + $0x3c] sm:$0xf]
    %v75 = vunpack.c.l.b16 %v51
    %v76 = vunpack.c.l.b16 %v52
    %v77 = vunpack.c.l.b16 %v53
    %v78 = vunpack.c.l.b16 %v54
    %v79 = vpack.c.b16 %v76, %v75
    %v80 = vpack.c.b16 %v78, %v77
    %v99 = vunpack.c.l.b16 %v55
    %v100 = vunpack.c.l.b16 %v56
    %v101 = vunpack.c.l.b16 %v57
    %v102 = vunpack.c.l.b16 %v58
    %v103 = vunpack.c.l.b16 %v59
    %v104 = vunpack.c.l.b16 %v60
    %v105 = vunpack.c.l.b16 %v61
    %v106 = vunpack.c.l.b16 %v62
    %v107 = vunpack.c.l.b16 %v63
    %v108 = vunpack.c.l.b16 %v64
    %v109 = vunpack.c.l.b16 %v65
    %v110 = vunpack.c.l.b16 %v66
    %v111 = vunpack.c.l.b16 %v67
    %v112 = vunpack.c.l.b16 %v68
    %v113 = vunpack.c.l.b16 %v69
    %v114 = vunpack.c.l.b16 %v70
    %v115 = vpack.c.b16 %v100, %v99
    %v116 = vpack.c.b16 %v102, %v101
    %v117 = vpack.c.b16 %v104, %v103
    %v118 = vpack.c.b16 %v106, %v105
    %v119 = vpack.c.b16 %v108, %v107
    %v120 = vpack.c.b16 %v110, %v109
    %v121 = vpack.c.b16 %v112, %v111
    %v122 = vpack.c.b16 %v114, %v113
    %131 = vmatprep.subr.bf16.mxu0 0
    %132 = vmatpush1.bf16.xpose.msra.mxu0 %v115
    %133 = vmatprep.subr.bf16.mxu0 0
    %134 = vmatpush1.bf16.xpose.msra.mxu0 %v116
    %135 = vmatprep.subr.bf16.mxu0 0
    %136 = vmatpush1.bf16.xpose.msra.mxu0 %v117
    %137 = vmatprep.subr.bf16.mxu0 0
    %138 = vmatpush1.bf16.xpose.msra.mxu0 %v118
    %139 = vmatprep.subr.bf16.mxu0 0
    %140 = vmatpush1.bf16.xpose.msra.mxu0 %v119
    %141 = vmatprep.subr.bf16.mxu0 0
    %142 = vmatpush1.bf16.xpose.msra.mxu0 %v120
    %143 = vmatprep.subr.bf16.mxu0 0
    %144 = vmatpush1.bf16.xpose.msra.mxu0 %v121
    %145 = vmatprep.subr.bf16.mxu0 0
    %146 = vmatpush1.bf16.xpose.msra.mxu0 %v122
    %147 = vmatprep.subr.bf16.mxu0 0
    %148 = vmatpush1.bf16.xpose.msra.mxu0 0
    %149 = vmatprep.subr.bf16.mxu0 0
    %150 = vmatpush1.bf16.xpose.msra.mxu0 0
    %151 = vmatprep.subr.bf16.mxu0 0
    %152 = vmatpush1.bf16.xpose.msra.mxu0 0
    %153 = vmatprep.subr.bf16.mxu0 0
    %154 = vmatpush1.bf16.xpose.msra.mxu0 0
    %155 = vmatprep.subr.bf16.mxu0 0
    %156 = vmatpush1.bf16.xpose.msra.mxu0 0
    %157 = vmatprep.subr.bf16.mxu0 0
    %158 = vmatpush1.bf16.xpose.msra.mxu0 0
    %159 = vmatprep.subr.bf16.mxu0 0
    %160 = vmatpush1.bf16.xpose.msra.mxu0 0
    %161 = vmatprep.subr.bf16.mxu0 0
    %162 = vmatpush1.bf16.xpose.msra.mxu0 0
    %163 = vmatprep.mubr.bf16.mxu0 0
    %164 = vmatmul.mubr.bf16.gmra.mrb[0].mxu0 %v79
    %v165 = vpop.f32.mrb[0].mxu0
    %v166 = vadd.f32 0.0, %v165
    %v167 = vpop.f32.mrb[0].mxu0
    %v168 = vpop.f32.mrb[0].mxu0
    %v169 = vadd.f32 0.0, %v168
    %v170 = vpop.f32.mrb[0].mxu0
    %171 = vmatprep.mubr.bf16.mxu0 0
    %172 = vmatmul.mubr.bf16.gmra.mrb[0].mxu0 %v80
    %v173 = vpop.f32.mrb[0].mxu0
    %v174 = vadd.f32 0.0, %v173
    %v175 = vpop.f32.mrb[0].mxu0
    %v176 = vpop.f32.mrb[0].mxu0
    %v177 = vadd.f32 0.0, %v176
    %v178 = vpop.f32.mrb[0].mxu0
    %179 = vdwg.mxu0
    %v180 = vld [vmem:[%s0] sm:$0xff]
    %v181 = vld [vmem:[%s0 + $0x8] sm:$0xff]
    %v182 = vld [vmem:[%s0 + $0x10] sm:$0xff]
    %v183 = vld [vmem:[%s0 + $0x18] sm:$0xff]
    %v184 = vld [vmem:[%s1] sm:$0x1]
    %185 = vset.pattern.permute.xlu0 0
    %186 = vperm.xlu0 %185, %v180
    %v187 = vpop.permute.xlu0 %186
    %188 = vset.pattern.permute.xlu0 0
    %189 = vperm.xlu0 %188, %v181
    %v190 = vpop.permute.xlu0 %189
    %191 = vset.pattern.permute.xlu0 0
    %192 = vperm.xlu0 %191, %v182
    %v193 = vpop.permute.xlu0 %192
    %194 = vset.pattern.permute.xlu0 0
    %195 = vperm.xlu0 %194, %v183
    %v196 = vpop.permute.xlu0 %195
    %v197 = vlaneseq
    %v198 = vshrl.u32 %v197, 7
    %v199 = vsub.s32 0, %v198
    %v200 = vrot.slane %v184, %v199
    %vm201 = vcmp.eq.s32.totalorder %v187, %v200
    %vm202 = vcmp.eq.s32.totalorder %v190, %v200
    %vm203 = vcmp.eq.s32.totalorder %v193, %v200
    %vm204 = vcmp.eq.s32.totalorder %v196, %v200
    %s205 = smul.u32 0, 32
    %s206 = sadd.s32 0, 1
    %s207 = smul.u32 %s206, 128
    %p208 = scmp.lt.s32.totalorder %s205, %s207
    %s209 = smul.u32 0, 128
    %s210 = sadd.s32 0, 1
    %s211 = smul.u32 %s210, 32
    %p212 = scmp.lt.s32.totalorder %s209, %s211
    %p213 = pnand %p208, %p212
    %p214 = pneg %p213
    %p215 = por %p214, %p34
    // Predicated region
    $region26: #{tpu_custom_call.1} parent=1 // pred_check
      %p216 = pneg %p215
    $region27: #{tpu_custom_call.1} parent=1 // pred_check_branch
      %218 = sbr.rel (%p216) target = $region29
    $region28: #{tpu_custom_call.1} parent=1 // pred_region
      %v219 = vlaneseq
      %v220 = vshrl.u32 %v219, 7
      %v221 = vadd.s32 %v220, 8
      %v222 = vadd.s32 %v220, 16
      %v223 = vadd.s32 %v220, 24
      %v224 = vstv %s205
      %v225 = vadd.s32 %v224, %v220
      %v226 = vadd.s32 %v224, %v221
      %v227 = vadd.s32 %v224, %v222
      %v228 = vadd.s32 %v224, %v223
      %v229 = vlaneseq
      %v230 = vand.u32 %v229, 127
      %v231 = vstv %s209
      %v232 = vadd.s32 %v231, %v230
      %vm233 = vcmp.lt.s32.totalorder %v232, 8
      %vm234 = vcmp.ne.s32.totalorder %v225, %v232
      %vm235 = vcmp.ne.s32.totalorder %v226, %v232
      %vm236 = vcmp.ne.s32.totalorder %v227, %v232
      %vm237 = vcmp.ne.s32.totalorder %v228, %v232
      %vm238 = vmand %vm233, %vm234
      %vm239 = vmand %vm233, %vm235
      %vm240 = vmand %vm233, %vm236
      %vm241 = vmand %vm233, %vm237
      %v242 = vsel %vm238, %v166, -1e+30
      %v243 = vsel %vm239, %v169, -1e+30
      %v244 = vsel %vm240, %v174, -1e+30
      %v245 = vsel %vm241, %v177, -1e+30
      %vm246 = vmand %vm238, %vm201
      %vm247 = vmand %vm239, %vm202
      %vm248 = vmand %vm240, %vm203
      %vm249 = vmand %vm241, %vm204
      %v250 = vld [vmem:[#allocation2] sm:$0xff]
      %v251 = vld [vmem:[#allocation2 + $0x8] sm:$0xff]
      %v252 = vld [vmem:[#allocation2 + $0x10] sm:$0xff]
      %v253 = vld [vmem:[#allocation2 + $0x18] sm:$0xff]
      %254 = vmax.xlane.f32.xlu0 %v242
      %v255 = vpop.xlane.xlu0 %254
      %256 = vmax.xlane.f32.xlu0 %v243
      %v257 = vpop.xlane.xlu0 %256
      %258 = vmax.xlane.f32.xlu0 %v244
      %v259 = vpop.xlane.xlu0 %258
      %260 = vmax.xlane.f32.xlu0 %v245
      %v261 = vpop.xlane.xlu0 %260
      %v262 = vmax.f32 %v250, %v255
      %v263 = vmax.f32 %v251, %v257
      %v264 = vmax.f32 %v252, %v259
      %v265 = vmax.f32 %v253, %v261
      %v266 = vld [vmem:[#allocation3] sm:$0xff]
      %v267 = vld [vmem:[#allocation3 + $0x8] sm:$0xff]
      %v268 = vld [vmem:[#allocation3 + $0x10] sm:$0xff]
      %v269 = vld [vmem:[#allocation3 + $0x18] sm:$0xff]
      %v270 = vsub.f32 %v250, %v262
      %v271 = vsub.f32 %v251, %v263
      %v272 = vsub.f32 %v252, %v264
      %v273 = vsub.f32 %v253, %v265
      %v274 = vmul.f32 %v270, 1.442695
      %v275 = vpow.pop %v274
      %v276 = vmul.f32 %v271, 1.442695
      %v277 = vpow.pop %v276
      %v278 = vmul.f32 %v272, 1.442695
      %v279 = vpow.pop %v278
      %v280 = vmul.f32 %v273, 1.442695
      %v281 = vpow.pop %v280
      %v282 = vmul.f32 %v266, %v275
      %v283 = vmul.f32 %v267, %v277
      %v284 = vmul.f32 %v268, %v279
      %v285 = vmul.f32 %v269, %v281
      %287 = vset.pattern.permute.xlu0 0
      %288 = vperm.xlu0 %287, %v262
      %v289 = vpop.permute.xlu0 %288
      %292 = vset.pattern.permute.xlu0 0
      %293 = vperm.xlu0 %292, %v263
      %v294 = vpop.permute.xlu0 %293
      %297 = vset.pattern.permute.xlu0 0
      %298 = vperm.xlu0 %297, %v264
      %v299 = vpop.permute.xlu0 %298
      %302 = vset.pattern.permute.xlu0 0
      %303 = vperm.xlu0 %302, %v265
      %v304 = vpop.permute.xlu0 %303
      %v306 = vsub.f32 %v242, %v289
      %v307 = vsub.f32 %v243, %v294
      %v308 = vsub.f32 %v244, %v299
      %v309 = vsub.f32 %v245, %v304
      %v310 = vmul.f32 %v306, 1.442695
      %v311 = vpow.pop %v310
      %v312 = vmul.f32 %v307, 1.442695
      %v313 = vpow.pop %v312
      %v314 = vmul.f32 %v308, 1.442695
      %v315 = vpow.pop %v314
      %v316 = vmul.f32 %v309, 1.442695
      %v317 = vpow.pop %v316
      %318 = vadd.xlane.f32.xlu0 %v311
      %v319 = vpop.xlane.xlu0 %318
      %320 = vadd.xlane.f32.xlu0 %v313
      %v321 = vpop.xlane.xlu0 %320
      %322 = vadd.xlane.f32.xlu0 %v315
      %v323 = vpop.xlane.xlu0 %322
      %324 = vadd.xlane.f32.xlu0 %v317
      %v325 = vpop.xlane.xlu0 %324
      %v326 = vadd.f32 %v282, %v319
      %v327 = vadd.f32 %v283, %v321
      %v328 = vadd.f32 %v284, %v323
      %v329 = vadd.f32 %v285, %v325
      %vm330 = vcmask 7168
      %331 = vst.msk [vmem:[#allocation3] sm:$0xff] %vm330, %v326
      %332 = vst.msk [vmem:[#allocation3 + $0x8] sm:$0xff] %vm330, %v327
      %333 = vst.msk [vmem:[#allocation3 + $0x10] sm:$0xff] %vm330, %v328
      %334 = vst.msk [vmem:[#allocation3 + $0x18] sm:$0xff] %vm330, %v329
      %335 = vst.msk [vmem:[#allocation2] sm:$0xff] %vm330, %v262
      %336 = vst.msk [vmem:[#allocation2 + $0x8] sm:$0xff] %vm330, %v263
      %337 = vst.msk [vmem:[#allocation2 + $0x10] sm:$0xff] %vm330, %v264
      %338 = vst.msk [vmem:[#allocation2 + $0x18] sm:$0xff] %vm330, %v265
      %v339 = vld [vmem:[%s4] sm:$0xff]
      %v340 = vld [vmem:[%s4 + $0x8] sm:$0xff]
      %v341 = vld [vmem:[%s4 + $0x10] sm:$0xff]
      %v342 = vld [vmem:[%s4 + $0x18] sm:$0xff]
      %v343 = vsel %vm246, %v242, 0.0
      %v344 = vsel %vm247, %v243, 0.0
      %v345 = vsel %vm248, %v244, 0.0
      %v346 = vsel %vm249, %v245, 0.0
      %347 = vadd.xlane.f32.xlu0 %v343
      %v348 = vpop.xlane.xlu0 %347
      %349 = vadd.xlane.f32.xlu0 %v344
      %v350 = vpop.xlane.xlu0 %349
      %351 = vadd.xlane.f32.xlu0 %v345
      %v352 = vpop.xlane.xlu0 %351
      %353 = vadd.xlane.f32.xlu0 %v346
      %v354 = vpop.xlane.xlu0 %353
      %v355 = vadd.f32 %v339, %v348
      %v356 = vadd.f32 %v340, %v350
      %v357 = vadd.f32 %v341, %v352
      %v358 = vadd.f32 %v342, %v354
      %359 = vst.msk [vmem:[%s4] sm:$0xff] %vm330, %v355
      %360 = vst.msk [vmem:[%s4 + $0x8] sm:$0xff] %vm330, %v356
      %361 = vst.msk [vmem:[%s4 + $0x10] sm:$0xff] %vm330, %v357
      %362 = vst.msk [vmem:[%s4 + $0x18] sm:$0xff] %vm330, %v358
    $region29: #{tpu_custom_call.1} parent=1 // pred_fallthru
      _
    %p363 = pneg %p215
    // Predicated region
    $region30: #{tpu_custom_call.1} parent=1 // pred_check
      _
    $region31: #{tpu_custom_call.1} parent=1 // pred_check_branch
      %365 = sbr.rel (%p215) target = $region33
    $region32: #{tpu_custom_call.1} parent=1 // pred_region
      %v366 = vld [vmem:[#allocation2] sm:$0xff]
      %v367 = vld [vmem:[#allocation2 + $0x8] sm:$0xff]
      %v368 = vld [vmem:[#allocation2 + $0x10] sm:$0xff]
      %v369 = vld [vmem:[#allocation2 + $0x18] sm:$0xff]
      %370 = vmax.xlane.f32.xlu0 %v166
      %v371 = vpop.xlane.xlu0 %370
      %372 = vmax.xlane.f32.xlu0 %v169
      %v373 = vpop.xlane.xlu0 %372
      %374 = vmax.xlane.f32.xlu0 %v174
      %v375 = vpop.xlane.xlu0 %374
      %376 = vmax.xlane.f32.xlu0 %v177
      %v377 = vpop.xlane.xlu0 %376
      %v378 = vmax.f32 %v366, %v371
      %v379 = vmax.f32 %v367, %v373
      %v380 = vmax.f32 %v368, %v375
      %v381 = vmax.f32 %v369, %v377
      %v382 = vld [vmem:[#allocation3] sm:$0xff]
      %v383 = vld [vmem:[#allocation3 + $0x8] sm:$0xff]
      %v384 = vld [vmem:[#allocation3 + $0x10] sm:$0xff]
      %v385 = vld [vmem:[#allocation3 + $0x18] sm:$0xff]
      %v386 = vsub.f32 %v366, %v378
      %v387 = vsub.f32 %v367, %v379
      %v388 = vsub.f32 %v368, %v380
      %v389 = vsub.f32 %v369, %v381
      %v390 = vmul.f32 %v386, 1.442695
      %v391 = vpow.pop %v390
      %v392 = vmul.f32 %v387, 1.442695
      %v393 = vpow.pop %v392
      %v394 = vmul.f32 %v388, 1.442695
      %v395 = vpow.pop %v394
      %v396 = vmul.f32 %v389, 1.442695
      %v397 = vpow.pop %v396
      %v398 = vmul.f32 %v382, %v391
      %v399 = vmul.f32 %v383, %v393
      %v400 = vmul.f32 %v384, %v395
      %v401 = vmul.f32 %v385, %v397
      %403 = vset.pattern.permute.xlu0 0
      %404 = vperm.xlu0 %403, %v378
      %v405 = vpop.permute.xlu0 %404
      %408 = vset.pattern.permute.xlu0 0
      %409 = vperm.xlu0 %408, %v379
      %v410 = vpop.permute.xlu0 %409
      %413 = vset.pattern.permute.xlu0 0
      %414 = vperm.xlu0 %413, %v380
      %v415 = vpop.permute.xlu0 %414
      %418 = vset.pattern.permute.xlu0 0
      %419 = vperm.xlu0 %418, %v381
      %v420 = vpop.permute.xlu0 %419
      %v422 = vsub.f32 %v166, %v405
      %v423 = vsub.f32 %v169, %v410
      %v424 = vsub.f32 %v174, %v415
      %v425 = vsub.f32 %v177, %v420
      %v426 = vmul.f32 %v422, 1.442695
      %v427 = vpow.pop %v426
      %v428 = vmul.f32 %v423, 1.442695
      %v429 = vpow.pop %v428
      %v430 = vmul.f32 %v424, 1.442695
      %v431 = vpow.pop %v430
      %v432 = vmul.f32 %v425, 1.442695
      %v433 = vpow.pop %v432
      %434 = vadd.xlane.f32.xlu0 %v427
      %v435 = vpop.xlane.xlu0 %434
      %436 = vadd.xlane.f32.xlu0 %v429
      %v437 = vpop.xlane.xlu0 %436
      %438 = vadd.xlane.f32.xlu0 %v431
      %v439 = vpop.xlane.xlu0 %438
      %440 = vadd.xlane.f32.xlu0 %v433
      %v441 = vpop.xlane.xlu0 %440
      %v442 = vadd.f32 %v398, %v435
      %v443 = vadd.f32 %v399, %v437
      %v444 = vadd.f32 %v400, %v439
      %v445 = vadd.f32 %v401, %v441
      %vm446 = vcmask 7168
      %447 = vst.msk [vmem:[#allocation3] sm:$0xff] %vm446, %v442
      %448 = vst.msk [vmem:[#allocation3 + $0x8] sm:$0xff] %vm446, %v443
      %449 = vst.msk [vmem:[#allocation3 + $0x10] sm:$0xff] %vm446, %v444
      %450 = vst.msk [vmem:[#allocation3 + $0x18] sm:$0xff] %vm446, %v445
      %451 = vst.msk [vmem:[#allocation2] sm:$0xff] %vm446, %v378
      %452 = vst.msk [vmem:[#allocation2 + $0x8] sm:$0xff] %vm446, %v379
      %453 = vst.msk [vmem:[#allocation2 + $0x10] sm:$0xff] %vm446, %v380
      %454 = vst.msk [vmem:[#allocation2 + $0x18] sm:$0xff] %vm446, %v381
      %v455 = vld [vmem:[%s4] sm:$0xff]
      %v456 = vld [vmem:[%s4 + $0x8] sm:$0xff]
      %v457 = vld [vmem:[%s4 + $0x10] sm:$0xff]
      %v458 = vld [vmem:[%s4 + $0x18] sm:$0xff]
      %v459 = vsel %vm201, %v166, 0.0
      %v460 = vsel %vm202, %v169, 0.0
      %v461 = vsel %vm203, %v174, 0.0
      %v462 = vsel %vm204, %v177, 0.0
      %463 = vadd.xlane.f32.xlu0 %v459
      %v464 = vpop.xlane.xlu0 %463
      %465 = vadd.xlane.f32.xlu0 %v460
      %v466 = vpop.xlane.xlu0 %465
      %467 = vadd.xlane.f32.xlu0 %v461
      %v468 = vpop.xlane.xlu0 %467
      %469 = vadd.xlane.f32.xlu0 %v462
      %v470 = vpop.xlane.xlu0 %469
      %v471 = vadd.f32 %v455, %v464
      %v472 = vadd.f32 %v456, %v466
      %v473 = vadd.f32 %v457, %v468
      %v474 = vadd.f32 %v458, %v470
      %475 = vst.msk [vmem:[%s4] sm:$0xff] %vm446, %v471
      %476 = vst.msk [vmem:[%s4 + $0x8] sm:$0xff] %vm446, %v472
      %477 = vst.msk [vmem:[%s4 + $0x10] sm:$0xff] %vm446, %v473
      %478 = vst.msk [vmem:[%s4 + $0x18] sm:$0xff] %vm446, %v474
    $region33: #{tpu_custom_call.1} parent=1 // pred_fallthru
      _
    // Predicated region
    $region34: #{tpu_custom_call.1} parent=1 // pred_check
      %p479 = pneg %p34
    $region35: #{tpu_custom_call.1} parent=1 // pred_check_branch
      %481 = sbr.rel (%p479) target = $region37
    $region36: #{tpu_custom_call.1} parent=1 // pred_region
      %v482 = vld [vmem:[#allocation2] sm:$0xff]
      %v483 = vld [vmem:[#allocation2 + $0x8] sm:$0xff]
      %v484 = vld [vmem:[#allocation2 + $0x10] sm:$0xff]
      %v485 = vld [vmem:[#allocation2 + $0x18] sm:$0xff]
      %v486 = vld [vmem:[#allocation3] sm:$0xff]
      %v487 = vld [vmem:[#allocation3 + $0x8] sm:$0xff]
      %v488 = vld [vmem:[#allocation3 + $0x10] sm:$0xff]
      %v489 = vld [vmem:[#allocation3 + $0x18] sm:$0xff]
      %v490 = vsub.f32 0.0, %v482
      %v491 = vsub.f32 0.0, %v483
      %v492 = vsub.f32 0.0, %v484
      %v493 = vsub.f32 0.0, %v485
      %v494 = vmin.f32 %v490, 80.0
      %v495 = vmin.f32 %v491, 80.0
      %v496 = vmin.f32 %v492, 80.0
      %v497 = vmin.f32 %v493, 80.0
      %v498 = vmul.f32 %v494, 1.442695
      %v499 = vpow.pop %v498
      %v500 = vmul.f32 %v495, 1.442695
      %v501 = vpow.pop %v500
      %v502 = vmul.f32 %v496, 1.442695
      %v503 = vpow.pop %v502
      %v504 = vmul.f32 %v497, 1.442695
      %v505 = vpow.pop %v504
      %v506 = vmul.f32 %v499, 1e-08
      %v507 = vmul.f32 %v501, 1e-08
      %v508 = vmul.f32 %v503, 1e-08
      %v509 = vmul.f32 %v505, 1e-08
      %v510 = vadd.f32 %v486, %v506
      %v511 = vadd.f32 %v487, %v507
      %v512 = vadd.f32 %v488, %v508
      %v513 = vadd.f32 %v489, %v509
      %v514 = vlog2.pop %v510
      %v515 = vmul.f32 %v514, 0.6931472
      %v516 = vlog2.pop %v511
      %v517 = vmul.f32 %v516, 0.6931472
      %v518 = vlog2.pop %v512
      %v519 = vmul.f32 %v518, 0.6931472
      %v520 = vlog2.pop %v513
      %v521 = vmul.f32 %v520, 0.6931472
      %v522 = vadd.f32 %v482, %v515
      %v523 = vadd.f32 %v483, %v517
      %v524 = vadd.f32 %v484, %v519
      %v525 = vadd.f32 %v485, %v521
      %vm526 = vcmask 7168
      %527 = vst.msk [vmem:[%s5] sm:$0xff] %vm526, %v522
      %528 = vst.msk [vmem:[%s5 + $0x8] sm:$0xff] %vm526, %v523
      %529 = vst.msk [vmem:[%s5 + $0x10] sm:$0xff] %vm526, %v524
      %530 = vst.msk [vmem:[%s5 + $0x18] sm:$0xff] %vm526, %v525
    $region37: #{tpu_custom_call.1} parent=1 // pred_fallthru
      _
    // Predicated region
    $region38: #{tpu_custom_call.1} parent=1 // pred_check
      _
    $region39: #{tpu_custom_call.1} parent=1 // pred_check_branch
      %532 = sbr.rel (0) target = $region41
    $region40: #{tpu_custom_call.1} parent=1 // pred_region
      _
    $region41: #{tpu_custom_call.1} parent=1 // pred_fallthru
      _
    // Predicated region
    $region42: #{tpu_custom_call.1} parent=1 // pred_check
      _
    $region43: #{tpu_custom_call.1} parent=1 // pred_check_branch
      %534 = sbr.rel (0) target = $region45
    $region44: #{tpu_custom_call.1} parent=1 // pred_region
      _
    $region45: #{tpu_custom_call.1} parent=1 // pred_fallthru
      _
    // Predicated region
    $region46: #{tpu_custom_call.1} parent=1 // pred_check
      _
    $region47: #{tpu_custom_call.1} parent=1 // pred_check_branch
      %536 = sbr.rel (0) target = $region49
    $region48: #{tpu_custom_call.1} parent=1 // pred_region
      _
    $region49: #{tpu_custom_call.1} parent=1 // pred_fallthru
      _
    // Predicated region
    $region50: #{tpu_custom_call.1} parent=1 // pred_check
      _
    $region51: #{tpu_custom_call.1} parent=1 // pred_check_branch
      %538 = sbr.rel (0) target = $region53
    $region52: #{tpu_custom_call.1} parent=1 // pred_region
      _
    $region53: #{tpu_custom_call.1} parent=1 // pred_fallthru
      _
    %539 = vsyncpa [#allocation5], 1

</llo_original>
